<compile_context>
chip_gen: v7x
topology: tpu7x:2x2x1
jax: 0.10.0
libtpu: 0.0.40
codegen_flags: <defaults>
</compile_context>

<pallas_src>
import functools

import jax
import jax.numpy as jnp
from jax.experimental import pallas as pl
from jax.experimental.pallas import tpu as pltpu


def _zero_non_finite(x):
    # torch.nan_to_num(x, nan=0, posinf=0, neginf=0) == where(isfinite(x), x, 0)
    return jnp.where(jnp.isfinite(x), x, jnp.zeros_like(x))


def _ycrcb2rgb_kernel(y_ref, cr_ref, cb_ref, o_ref, *, offset):
    # y_ref/cr_ref/cb_ref: (1, TH, LANE)   o_ref: (1, 3, TH, LANE)
    y = y_ref[0]
    cr = _zero_non_finite(cr_ref[0] - jnp.float32(offset))
    cb = _zero_non_finite(cb_ref[0] - jnp.float32(offset))

    def finish(x):
        # clip maps +inf -> 1 and -inf -> 0; NaN propagates and is zeroed after,
        # matching torch.clamp + torch.nan_to_num(nan=0, posinf=1, neginf=0).
        x = jnp.clip(x, 0.0, 1.0)
        return jnp.where(jnp.isnan(x), jnp.zeros_like(x), x)

    o_ref[0, 0] = finish(y + jnp.float32(1.403) * cr).astype(o_ref.dtype)
    o_ref[0, 1] = finish(
        y - jnp.float32(0.344) * cb - jnp.float32(0.714) * cr
    ).astype(o_ref.dtype)
    o_ref[0, 2] = finish(y + jnp.float32(1.773) * cb).astype(o_ref.dtype)


def _choose_layout(H, W):
    """Pick a lane-dense flat layout (rows, lane) with rows * lane == H * W."""
    HW = H * W
    for lane in (1024, 512, 256, 128):
        if HW % lane == 0:
            return HW // lane, lane
    # Fallback: keep the natural (H, W) layout (odd / tiny widths).
    return H, W


def ycrcb2rgb(Y, Cr, Cb, offset=0.5):
    """Y, Cr, Cb: [N, 1, H, W] float -> RGB [N, 3, H, W]."""
    assert Y.shape == Cr.shape == Cb.shape
    N, C, H, W = Y.shape
    assert C == 1, "YCrCb2RGB expects single-channel Y/Cr/Cb planes"

    rows, lane = _choose_layout(H, W)

    # Free, contiguous reshapes (no data movement).
    y3 = Y.reshape(N, rows, lane)
    cr3 = Cr.reshape(N, rows, lane)
    cb3 = Cb.reshape(N, rows, lane)

    # Row tile targeting ~512 KiB f32 per input plane; multiple of 8 sublanes,
    # or the full `rows` extent when the image is small.
    target_rows = max(8, (131072 // lane) // 8 * 8)
    th = rows if target_rows >= rows else target_rows

    grid = (N, pl.cdiv(rows, th))

    kernel = functools.partial(_ycrcb2rgb_kernel, offset=float(offset))

    in_spec = pl.BlockSpec((1, th, lane), lambda n, r: (n, r, 0))
    out_spec = pl.BlockSpec((1, 3, th, lane), lambda n, r: (n, 0, r, 0))

    itemsize = jnp.dtype(Y.dtype).itemsize
    npix = N * H * W

    out = pl.pallas_call(
        kernel,
        out_shape=jax.ShapeDtypeStruct((N, 3, rows, lane), Y.dtype),
        grid_spec=pltpu.PrefetchScalarGridSpec(
            num_scalar_prefetch=0,
            grid=grid,
            in_specs=[in_spec, in_spec, in_spec],
            out_specs=out_spec,
        ),
        compiler_params=pltpu.CompilerParams(
            dimension_semantics=("parallel", "parallel"),
        ),
        cost_estimate=pl.CostEstimate(
            flops=12 * npix,
            transcendentals=0,
            bytes_accessed=6 * npix * itemsize,  # 3 input planes + 3 output planes
        ),
    )(y3, cr3, cb3)

    # Free, contiguous reshape back to NCHW.
    return out.reshape(N, 3, H, W)


def _reference(Y, Cr, Cb, offset=0.5):
    Cr = jnp.nan_to_num(Cr - offset, nan=0.0, posinf=0.0, neginf=0.0)
    Cb = jnp.nan_to_num(Cb - offset, nan=0.0, posinf=0.0, neginf=0.0)
    R = Y + 1.403 * Cr
    G = Y - 0.344 * Cb - 0.714 * Cr
    B = Y + 1.773 * Cb
    RGB = jnp.concatenate([R, G, B], axis=1)
    RGB = jnp.clip(RGB, 0.0, 1.0)
    RGB = jnp.nan_to_num(RGB, nan=0.0, posinf=1.0, neginf=0.0)
    return RGB


if __name__ == "__main__":
    key = jax.random.PRNGKey(0)
    k1, k2, k3 = jax.random.split(key, 3)
    N, H, W = 2, 16, 16
    Y = jax.random.uniform(k1, (N, 1, H, W), dtype=jnp.float32)
    Cr = jax.random.uniform(k2, (N, 1, H, W), dtype=jnp.float32)
    Cb = jax.random.uniform(k3, (N, 1, H, W), dtype=jnp.float32)

    # Exercise the NaN / Inf handling paths deterministically.
    Cr = Cr.at[0, 0, 0, 0].set(jnp.nan).at[0, 0, 0, 1].set(jnp.inf)
    Cb = Cb.at[0, 0, 1, 0].set(-jnp.inf).at[1, 0, 2, 2].set(jnp.nan)
    Y = Y.at[1, 0, 3, 3].set(jnp.nan).at[1, 0, 4, 4].set(jnp.inf)

    out = ycrcb2rgb(Y, Cr, Cb, offset=0.5)
    out = jax.block_until_ready(out)

    ref = _reference(Y, Cr, Cb, offset=0.5)
    assert out.shape == (N, 3, H, W)
    assert jnp.allclose(out, ref, atol=1e-6), "mismatch vs JAX reference"
    print("KERNEL_OK")
</pallas_src>

<mosaic_0001>
module attributes {stable_mosaic.version = 11 : i64} {
  func.func @_ycrcb2rgb_kernel(%arg0: i32, %arg1: i32, %arg2: memref<1x1x256xf32, #tpu.memory_space<vmem>>, %arg3: memref<1x1x256xf32, #tpu.memory_space<vmem>>, %arg4: memref<1x1x256xf32, #tpu.memory_space<vmem>>, %arg5: memref<1x3x1x256xf32, #tpu.memory_space<vmem>>) attributes {dimension_semantics = [#tpu.dimension_semantics<parallel>, #tpu.dimension_semantics<parallel>], iteration_bounds = array<i64: 2, 1>, scalar_prefetch = 0 : i64, scratch_operands = 0 : i64, tpu.core_type = #tpu.core_type<tc>, window_params = [{transform_indices = @transform_0, window_bounds = array<i64: 1, 1, 256>}, {transform_indices = @transform_1, window_bounds = array<i64: 1, 1, 256>}, {transform_indices = @transform_2, window_bounds = array<i64: 1, 1, 256>}, {transform_indices = @transform_3, window_bounds = array<i64: 1, 3, 1, 256>}]} {
    %c0 = arith.constant 0 : index
    %c0_0 = arith.constant 0 : index
    %c0_1 = arith.constant 0 : index
    %0 = vector.load %arg2[%c0, %c0_0, %c0_1] : memref<1x1x256xf32, #tpu.memory_space<vmem>>, vector<1x1x256xf32>
    %1 = vector.shape_cast %0 : vector<1x1x256xf32> to vector<1x256xf32>
    %c0_2 = arith.constant 0 : index
    %c0_3 = arith.constant 0 : index
    %c0_4 = arith.constant 0 : index
    %2 = vector.load %arg3[%c0_2, %c0_3, %c0_4] : memref<1x1x256xf32, #tpu.memory_space<vmem>>, vector<1x1x256xf32>
    %3 = vector.shape_cast %2 : vector<1x1x256xf32> to vector<1x256xf32>
    %cst = arith.constant 5.000000e-01 : f32
    %4 = vector.broadcast %cst : f32 to vector<1x256xf32>
    %5 = arith.subf %3, %4 : vector<1x256xf32>
    %6 = tpu.weird %5 : vector<1x256xf32> -> vector<1x256xi1>
    %cst_5 = arith.constant dense<true> : vector<1x256xi1>
    %7 = arith.xori %6, %cst_5 : vector<1x256xi1>
    %cst_6 = arith.constant 0.000000e+00 : f32
    %8 = vector.broadcast %cst_6 : f32 to vector<1x256xf32>
    %9 = arith.select %7, %5, %8 : vector<1x256xi1>, vector<1x256xf32>
    %c0_7 = arith.constant 0 : index
    %c0_8 = arith.constant 0 : index
    %c0_9 = arith.constant 0 : index
    %10 = vector.load %arg4[%c0_7, %c0_8, %c0_9] : memref<1x1x256xf32, #tpu.memory_space<vmem>>, vector<1x1x256xf32>
    %11 = vector.shape_cast %10 : vector<1x1x256xf32> to vector<1x256xf32>
    %cst_10 = arith.constant 5.000000e-01 : f32
    %12 = vector.broadcast %cst_10 : f32 to vector<1x256xf32>
    %13 = arith.subf %11, %12 : vector<1x256xf32>
    %14 = tpu.weird %13 : vector<1x256xf32> -> vector<1x256xi1>
    %cst_11 = arith.constant dense<true> : vector<1x256xi1>
    %15 = arith.xori %14, %cst_11 : vector<1x256xi1>
    %cst_12 = arith.constant 0.000000e+00 : f32
    %16 = vector.broadcast %cst_12 : f32 to vector<1x256xf32>
    %17 = arith.select %15, %13, %16 : vector<1x256xi1>, vector<1x256xf32>
    %cst_13 = arith.constant 1.403000e+00 : f32
    %18 = vector.broadcast %cst_13 : f32 to vector<1x256xf32>
    %19 = arith.mulf %18, %9 : vector<1x256xf32>
    %20 = arith.addf %1, %19 : vector<1x256xf32>
    %cst_14 = arith.constant 0.000000e+00 : f32
    %cst_15 = arith.constant 1.000000e+00 : f32
    %21 = vector.broadcast %cst_14 : f32 to vector<1x256xf32>
    %22 = arith.maximumf %21, %20 : vector<1x256xf32>
    %23 = vector.broadcast %cst_15 : f32 to vector<1x256xf32>
    %24 = arith.minimumf %23, %22 : vector<1x256xf32>
    %25 = arith.cmpf one, %24, %24 : vector<1x256xf32>
    %cst_16 = arith.constant 0.000000e+00 : f32
    %26 = vector.broadcast %cst_16 : f32 to vector<1x256xf32>
    %27 = arith.select %25, %26, %24 : vector<1x256xi1>, vector<1x256xf32>
    %c0_17 = arith.constant 0 : index
    %c0_18 = arith.constant 0 : index
    %c0_19 = arith.constant 0 : index
    %c0_20 = arith.constant 0 : index
    %28 = vector.load %arg5[%c0_17, %c0_18, %c0_19, %c0_20] : memref<1x3x1x256xf32, #tpu.memory_space<vmem>>, vector<1x1x1x256xf32>
    %29 = vector.shape_cast %28 : vector<1x1x1x256xf32> to vector<1x256xf32>
    %30 = vector.shape_cast %27 : vector<1x256xf32> to vector<1x1x1x256xf32>
    tpu.vector_store %arg5[%c0_17, %c0_18, %c0_19, %c0_20], %30 {strides = array<i32>} : memref<1x3x1x256xf32, #tpu.memory_space<vmem>>, vector<1x1x1x256xf32>,
    %cst_21 = arith.constant 3.440000e-01 : f32
    %31 = vector.broadcast %cst_21 : f32 to vector<1x256xf32>
    %32 = arith.mulf %31, %17 : vector<1x256xf32>
    %33 = arith.subf %1, %32 : vector<1x256xf32>
    %cst_22 = arith.constant 7.140000e-01 : f32
    %34 = vector.broadcast %cst_22 : f32 to vector<1x256xf32>
    %35 = arith.mulf %34, %9 : vector<1x256xf32>
    %36 = arith.subf %33, %35 : vector<1x256xf32>
    %cst_23 = arith.constant 0.000000e+00 : f32
    %cst_24 = arith.constant 1.000000e+00 : f32
    %37 = vector.broadcast %cst_23 : f32 to vector<1x256xf32>
    %38 = arith.maximumf %37, %36 : vector<1x256xf32>
    %39 = vector.broadcast %cst_24 : f32 to vector<1x256xf32>
    %40 = arith.minimumf %39, %38 : vector<1x256xf32>
    %41 = arith.cmpf one, %40, %40 : vector<1x256xf32>
    %cst_25 = arith.constant 0.000000e+00 : f32
    %42 = vector.broadcast %cst_25 : f32 to vector<1x256xf32>
    %43 = arith.select %41, %42, %40 : vector<1x256xi1>, vector<1x256xf32>
    %c0_26 = arith.constant 0 : index
    %c1 = arith.constant 1 : index
    %c0_27 = arith.constant 0 : index
    %c0_28 = arith.constant 0 : index
    %44 = vector.load %arg5[%c0_26, %c1, %c0_27, %c0_28] : memref<1x3x1x256xf32, #tpu.memory_space<vmem>>, vector<1x1x1x256xf32>
    %45 = vector.shape_cast %44 : vector<1x1x1x256xf32> to vector<1x256xf32>
    %46 = vector.shape_cast %43 : vector<1x256xf32> to vector<1x1x1x256xf32>
    tpu.vector_store %arg5[%c0_26, %c1, %c0_27, %c0_28], %46 {strides = array<i32>} : memref<1x3x1x256xf32, #tpu.memory_space<vmem>>, vector<1x1x1x256xf32>,
    %cst_29 = arith.constant 1.773000e+00 : f32
    %47 = vector.broadcast %cst_29 : f32 to vector<1x256xf32>
    %48 = arith.mulf %47, %17 : vector<1x256xf32>
    %49 = arith.addf %1, %48 : vector<1x256xf32>
    %cst_30 = arith.constant 0.000000e+00 : f32
    %cst_31 = arith.constant 1.000000e+00 : f32
    %50 = vector.broadcast %cst_30 : f32 to vector<1x256xf32>
    %51 = arith.maximumf %50, %49 : vector<1x256xf32>
    %52 = vector.broadcast %cst_31 : f32 to vector<1x256xf32>
    %53 = arith.minimumf %52, %51 : vector<1x256xf32>
    %54 = arith.cmpf one, %53, %53 : vector<1x256xf32>
    %cst_32 = arith.constant 0.000000e+00 : f32
    %55 = vector.broadcast %cst_32 : f32 to vector<1x256xf32>
    %56 = arith.select %54, %55, %53 : vector<1x256xi1>, vector<1x256xf32>
    %c0_33 = arith.constant 0 : index
    %c2 = arith.constant 2 : index
    %c0_34 = arith.constant 0 : index
    %c0_35 = arith.constant 0 : index
    %57 = vector.load %arg5[%c0_33, %c2, %c0_34, %c0_35] : memref<1x3x1x256xf32, #tpu.memory_space<vmem>>, vector<1x1x1x256xf32>
    %58 = vector.shape_cast %57 : vector<1x1x1x256xf32> to vector<1x256xf32>
    %59 = vector.shape_cast %56 : vector<1x256xf32> to vector<1x1x1x256xf32>
    tpu.vector_store %arg5[%c0_33, %c2, %c0_34, %c0_35], %59 {strides = array<i32>} : memref<1x3x1x256xf32, #tpu.memory_space<vmem>>, vector<1x1x1x256xf32>,
    return
  }
  func.func @transform_0(%arg0: i32, %arg1: i32) -> (i32, i32, i32) {
    %c0_i32 = arith.constant 0 : i32
    %c0_i32_0 = arith.constant 0 : i32
    return %arg0, %arg1, %c0_i32 : i32, i32, i32
  }
  func.func @transform_1(%arg0: i32, %arg1: i32) -> (i32, i32, i32) {
    %c0_i32 = arith.constant 0 : i32
    %c0_i32_0 = arith.constant 0 : i32
    return %arg0, %arg1, %c0_i32 : i32, i32, i32
  }
  func.func @transform_2(%arg0: i32, %arg1: i32) -> (i32, i32, i32) {
    %c0_i32 = arith.constant 0 : i32
    %c0_i32_0 = arith.constant 0 : i32
    return %arg0, %arg1, %c0_i32 : i32, i32, i32
  }
  func.func @transform_3(%arg0: i32, %arg1: i32) -> (i32, i32, i32, i32) {
    %c0_i32 = arith.constant 0 : i32
    %c0_i32_0 = arith.constant 0 : i32
    %c0_i32_1 = arith.constant 0 : i32
    return %arg0, %c0_i32, %arg1, %c0_i32_0 : i32, i32, i32, i32
  }
}

</mosaic_0001>

<llo_original>
// kernel: tpu_custom_call.1
$region0: #{tpu_custom_call.1}
  #allocation0 [shape = 'u32[]', space=smem, size = 0x4, offset = 0x4, fixed_abs, tag = 'smem constant byte address 0x4 - core index']
  #allocation1 [shape = 'u32[144,128]{1,0:T(1,128)}', space=vmem, size = 0x12000, scoped, tag = 'internal scratch']
  %s0 = inlined_call_operand.hbm [shape: f32[2,1,256], index: 0, kind: input, shape index: {}]
  %s1 = inlined_call_operand.hbm [shape: f32[2,1,256], index: 1, kind: input, shape index: {}]
  %s2 = inlined_call_operand.vmem [shape: f32[2,1,256], index: 2, kind: input, shape index: {}]
  %s3 = inlined_call_operand.hbm [shape: f32[2,3,1,256], index: 3, kind: output, shape index: {}]
  %s4 = sld [smem:[#allocation0]]
  $region53: #{tpu_custom_call.1} parent=0
    _
  %s6 = ssub.s32 1, %s4
  %s7 = scalar_select 0, %s6, %s4
  $region1: #{tpu_custom_call.1} parent=0
    #allocation2 [shape = 'u8[2048]{0}', space=vmem, size = 0x800, scoped, tag = 'input window, operand 0']
    #allocation3 [shape = 's32[2]{0}', space=sflag, size = 0x8, scoped, tag = 'scoped memory for tpu_custom_call.1']
    #allocation4 [shape = 's32[2]{0}', space=sflag, size = 0x8, scoped, tag = 'scoped memory for tpu_custom_call.1']
    #allocation5 [shape = 'u8[2048]{0}', space=vmem, size = 0x800, scoped, tag = 'input window, operand 1']
    #allocation6 [shape = 's32[2]{0}', space=sflag, size = 0x8, scoped, tag = 'scoped memory for tpu_custom_call.1']
    #allocation7 [shape = 'u8[6144]{0}', space=vmem, size = 0x1800, scoped, tag = 'output window, operand 0']
    %8 = vsyncpa [#allocation3], 0
    %s9 = scalar_lea.sflag [#allocation3], 1
    %10 = vsyncpa %s9, 0
    %11 = vsyncpa [#allocation6], 0
    %s12 = scalar_lea.sflag [#allocation6], 1
    %13 = vsyncpa %s12, 0
    %14 = vsyncpa [#allocation4], 0
    %s15 = scalar_lea.sflag [#allocation4], 1
    %16 = vsyncpa %s15, 0
    loop: start=0, step=1, limit=4
    $region2: #{tpu_custom_call.1} parent=1 // loop_pre_header
      _
    $region3: #{tpu_custom_call.1} parent=1 // loop_header
      %s18 = sphi 0, %s22
      %p19 = scmp.ge.s32.totalorder %s18, 4
      %s25 = sphi 0, %s37
      %s26 = sphi 0, %s33
      %s27 = sphi 0, %s25
      %s28 = sphi 0, %s26
      %s29 = sphi 0, %s27
      %s30 = sphi 0, %s28
      %s42 = sphi 0, %s44
      %s45 = sphi 0, %s42
      %s46 = sphi 0, %s45
      %s62 = sphi 0, %s46
      %s70 = sphi 0, %s72
      %s73 = sphi 0, %s70
      %s74 = sphi 0, %s73
      %s90 = sphi 0, %s74
      %s98 = sphi 0, %s100
      %s101 = sphi 0, %s98
      %s102 = sphi 0, %s101
      %s118 = sphi 0, %s102
      %s126 = sphi 0, %s128
      %s129 = sphi 0, %s126
      %s130 = sphi 0, %s129
      %s146 = sphi 0, %s130
    $region4: #{tpu_custom_call.1} parent=1 // loop_header_branch
      %21 = sbr.rel (%p19) target = $region8
    $region5: #{tpu_custom_call.1} parent=1 // loop_body
      %s23 = ssub.s32 %s18, 1
      %s24 = ssub.s32 %s18, 2
      %s31 = sadd.s32 1, %s26
      %p32 = scmp.ge.s32.totalorder %s31, 1
      %s33 = scalar_select %p32, 0, %s31
      %s34 = sadd.s32 1, %s25
      %s35 = scalar_select %p32, %s34, %s25
      %p36 = scmp.ge.s32.totalorder %s35, 2
      %s37 = scalar_select %p36, 0, %s35
      %s38 = ssub.s32 %s25, %s37
      %s39 = ssub.s32 %s26, %s33
      %s40 = sor.u32 %s38, %s39
      %p41 = scmp.eq.s32.totalorder %s40, 0
      %s43 = sadd.s32 %s42, 1
      %s44 = scalar_select %p41, %s42, %s43
      %p47 = pneg %p41
      %p48 = scmp.eq.s32.totalorder %s18, 1
      %p49 = por %p47, %p48
      %p50 = scmp.ne.s32.totalorder %s42, %s45
      %p51 = scmp.eq.s32.totalorder %s18, 0
      %p52 = por %p50, %p51
      %p53 = scmp.ne.s32.totalorder %s42, %s45
      %p54 = scmp.eq.s32.totalorder %s23, 1
      %p55 = por %p53, %p54
      %p56 = scmp.ne.s32.totalorder %s45, %s46
      %p57 = scmp.eq.s32.totalorder %s23, 0
      %p58 = por %p56, %p57
      %p59 = scmp.ne.s32.totalorder %s45, %s46
      %p60 = scmp.eq.s32.totalorder %s24, 1
      %p61 = por %p59, %p60
      %p63 = scmp.ne.s32.totalorder %s46, %s62
      %p64 = scmp.eq.s32.totalorder %s24, 0
      %p65 = por %p63, %p64
      %s66 = ssub.s32 %s25, %s37
      %s67 = ssub.s32 %s26, %s33
      %s68 = sor.u32 %s66, %s67
      %p69 = scmp.eq.s32.totalorder %s68, 0
      %s71 = sadd.s32 %s70, 1
      %s72 = scalar_select %p69, %s70, %s71
      %p75 = pneg %p69
      %p76 = scmp.eq.s32.totalorder %s18, 1
      %p77 = por %p75, %p76
      %p78 = scmp.ne.s32.totalorder %s70, %s73
      %p79 = scmp.eq.s32.totalorder %s18, 0
      %p80 = por %p78, %p79
      %p81 = scmp.ne.s32.totalorder %s70, %s73
      %p82 = scmp.eq.s32.totalorder %s23, 1
      %p83 = por %p81, %p82
      %p84 = scmp.ne.s32.totalorder %s73, %s74
      %p85 = scmp.eq.s32.totalorder %s23, 0
      %p86 = por %p84, %p85
      %p87 = scmp.ne.s32.totalorder %s73, %s74
      %p88 = scmp.eq.s32.totalorder %s24, 1
      %p89 = por %p87, %p88
      %p91 = scmp.ne.s32.totalorder %s74, %s90
      %p92 = scmp.eq.s32.totalorder %s24, 0
      %p93 = por %p91, %p92
      %s94 = ssub.s32 %s25, %s37
      %s95 = ssub.s32 %s26, %s33
      %s96 = sor.u32 %s94, %s95
      %p97 = scmp.eq.s32.totalorder %s96, 0
      %s99 = sadd.s32 %s98, 1
      %s100 = scalar_select %p97, %s98, %s99
      %p103 = pneg %p97
      %p104 = scmp.eq.s32.totalorder %s18, 1
      %p105 = por %p103, %p104
      %p106 = scmp.ne.s32.totalorder %s98, %s101
      %p107 = scmp.eq.s32.totalorder %s18, 0
      %p108 = por %p106, %p107
      %p109 = scmp.ne.s32.totalorder %s98, %s101
      %p110 = scmp.eq.s32.totalorder %s23, 1
      %p111 = por %p109, %p110
      %p112 = scmp.ne.s32.totalorder %s101, %s102
      %p113 = scmp.eq.s32.totalorder %s23, 0
      %p114 = por %p112, %p113
      %p115 = scmp.ne.s32.totalorder %s101, %s102
      %p116 = scmp.eq.s32.totalorder %s24, 1
      %p117 = por %p115, %p116
      %p119 = scmp.ne.s32.totalorder %s102, %s118
      %p120 = scmp.eq.s32.totalorder %s24, 0
      %p121 = por %p119, %p120
      %s122 = ssub.s32 %s25, %s37
      %s123 = ssub.s32 %s26, %s33
      %s124 = sor.u32 %s122, %s123
      %p125 = scmp.eq.s32.totalorder %s124, 0
      %s127 = sadd.s32 %s126, 1
      %s128 = scalar_select %p125, %s126, %s127
      %p131 = pneg %p125
      %p132 = scmp.eq.s32.totalorder %s18, 1
      %p133 = por %p131, %p132
      %p134 = scmp.ne.s32.totalorder %s126, %s129
      %p135 = scmp.eq.s32.totalorder %s18, 0
      %p136 = por %p134, %p135
      %p137 = scmp.ne.s32.totalorder %s126, %s129
      %p138 = scmp.eq.s32.totalorder %s23, 1
      %p139 = por %p137, %p138
      %p140 = scmp.ne.s32.totalorder %s129, %s130
      %p141 = scmp.eq.s32.totalorder %s23, 0
      %p142 = por %p140, %p141
      %p143 = scmp.ne.s32.totalorder %s129, %s130
      %p144 = scmp.eq.s32.totalorder %s24, 1
      %p145 = por %p143, %p144
      %p147 = scmp.ne.s32.totalorder %s130, %s146
      %p148 = scmp.eq.s32.totalorder %s24, 0
      %p149 = por %p147, %p148
      %p150 = scmp.le.s32.totalorder 1, %s18
      %p151 = scmp.lt.s32.totalorder %s18, 3
      %p152 = pnand %p150, %p151
      %p153 = pneg %p152
      // Predicated region
      $region9: #{tpu_custom_call.1} parent=5 // pred_check
        _
      $region10: #{tpu_custom_call.1} parent=5 // pred_check_branch
        %155 = sbr.rel (%p152) target = $region12
      $region11: #{tpu_custom_call.1} parent=5 // pred_region
        %s156 = ssub.s32 %s18, 1
      $region12: #{tpu_custom_call.1} parent=5 // pred_fallthru
        _
      %p157 = scmp.lt.s32.totalorder %s18, 2
      // Predicated region
      $region13: #{tpu_custom_call.1} parent=5 // pred_check
        %p158 = pneg %p157
      $region14: #{tpu_custom_call.1} parent=5 // pred_check_branch
        %160 = sbr.rel (%p158) target = $region16
      $region15: #{tpu_custom_call.1} parent=5 // pred_region
        // Predicated region
        $region17: #{tpu_custom_call.1} parent=15 // pred_check
          %p161 = pneg %p52
        $region18: #{tpu_custom_call.1} parent=15 // pred_check_branch
          %163 = sbr.rel (%p161) target = $region20
        $region19: #{tpu_custom_call.1} parent=15 // pred_region
          %s164 = sand.u32 %s42, 1
          %s165 = scalar_lea.sflag [#allocation3], %s164
          %s166 = sand.u32 %s42, 1
          %s167 = smul.addr %s166, 2
          %s168 = scalar_lea.vmem [#allocation2], %s167
          %s170 = ssub.s32 32, 32
          %171 = vsyncadd %s165, %s170
          %s172 = smul.addr %s26, 2
          %s173 = smul.addr %s25, 2
          %s174 = sadd.s32 %s172, %s173
          %s175 = smul.addr %s174, 16
          %s176 = scalar_lea.hbm %s0, %s175
          %s178 = sshll.u32 %s168, 4
          %s179 = int_to_ptr.vmem [resolvable:$true] %s178
          %181 = dma.hbm_to_vmem [thread:$0]  %s176, 32, %s179, %s165
        $region20: #{tpu_custom_call.1} parent=15 // pred_fallthru
          _
        // Predicated region
        $region21: #{tpu_custom_call.1} parent=15 // pred_check
          %p182 = pneg %p80
        $region22: #{tpu_custom_call.1} parent=15 // pred_check_branch
          %184 = sbr.rel (%p182) target = $region24
        $region23: #{tpu_custom_call.1} parent=15 // pred_region
          %s185 = sand.u32 %s70, 1
          %s186 = scalar_lea.sflag [#allocation6], %s185
          %s187 = sand.u32 %s70, 1
          %s188 = smul.addr %s187, 2
          %s189 = scalar_lea.vmem [#allocation5], %s188
          %s191 = ssub.s32 32, 32
          %192 = vsyncadd %s186, %s191
          %s193 = smul.addr %s26, 2
          %s194 = smul.addr %s25, 2
          %s195 = sadd.s32 %s193, %s194
          %s196 = smul.addr %s195, 16
          %s197 = scalar_lea.hbm %s1, %s196
          %s199 = sshll.u32 %s189, 4
          %s200 = int_to_ptr.vmem [resolvable:$true] %s199
          %202 = dma.hbm_to_vmem [thread:$0]  %s197, 32, %s200, %s186
        $region24: #{tpu_custom_call.1} parent=15 // pred_fallthru
          _
        // Predicated region
        $region25: #{tpu_custom_call.1} parent=15 // pred_check
          %p203 = pneg %p108
        $region26: #{tpu_custom_call.1} parent=15 // pred_check_branch
          %205 = sbr.rel (%p203) target = $region28
        $region27: #{tpu_custom_call.1} parent=15 // pred_region
          %p206 = scmp.lt.s32.totalorder %s25, 1
          %s207 = scalar_select %p206, %s25, 1
          %p208 = scmp.lt.s32.totalorder %s26, 0
          %s209 = scalar_select %p208, %s26, 0
          %s210 = smul.addr %s209, 2
          %s211 = smul.addr %s207, 2
          %s212 = sadd.s32 %s210, %s211
          %s213 = scalar_lea.vmem %s2, %s212
        $region28: #{tpu_custom_call.1} parent=15 // pred_fallthru
          _
      $region16: #{tpu_custom_call.1} parent=5 // pred_fallthru
        _
      %p214 = scmp.le.s32.totalorder 1, %s18
      %p215 = scmp.lt.s32.totalorder %s18, 3
      %p216 = pnand %p214, %p215
      %p217 = pneg %p216
      // Predicated region
      $region29: #{tpu_custom_call.1} parent=5 // pred_check
        _
      $region30: #{tpu_custom_call.1} parent=5 // pred_check_branch
        %219 = sbr.rel (%p216) target = $region32
      $region31: #{tpu_custom_call.1} parent=5 // pred_region
        %s220 = ssub.s32 %s18, 1
        %s221 = sand.u32 %s45, 1
        %s222 = scalar_lea.sflag [#allocation3], %s221
        %s223 = sand.u32 %s45, 1
        %s224 = smul.addr %s223, 2
        %s225 = scalar_lea.vmem [#allocation2], %s224
        // Predicated region
        $region33: #{tpu_custom_call.1} parent=31 // pred_check
          %p226 = pneg %p58
        $region34: #{tpu_custom_call.1} parent=31 // pred_check_branch
          %228 = sbr.rel (%p226) target = $region36
        $region35: #{tpu_custom_call.1} parent=31 // pred_region
          %229 = dma.done %s222, 32
        $region36: #{tpu_custom_call.1} parent=31 // pred_fallthru
          _
        %s230 = sand.u32 %s73, 1
        %s231 = scalar_lea.sflag [#allocation6], %s230
        %s232 = sand.u32 %s73, 1
        %s233 = smul.addr %s232, 2
        %s234 = scalar_lea.vmem [#allocation5], %s233
        // Predicated region
        $region37: #{tpu_custom_call.1} parent=31 // pred_check
          %p235 = pneg %p86
        $region38: #{tpu_custom_call.1} parent=31 // pred_check_branch
          %237 = sbr.rel (%p235) target = $region40
        $region39: #{tpu_custom_call.1} parent=31 // pred_region
          %238 = dma.done %s231, 32
        $region40: #{tpu_custom_call.1} parent=31 // pred_fallthru
          _
        %s239 = sand.u32 %s45, 1
        %s240 = scalar_lea.sflag [#allocation3], %s239
        %s241 = sand.u32 %s45, 1
        %s242 = smul.addr %s241, 2
        %s243 = scalar_lea.vmem [#allocation2], %s242
        %p244 = pneg %p58
        %p245 = pneg %p55
        %s246 = sand.u32 %s73, 1
        %s247 = scalar_lea.sflag [#allocation6], %s246
        %s248 = sand.u32 %s73, 1
        %s249 = smul.addr %s248, 2
        %s250 = scalar_lea.vmem [#allocation5], %s249
        %p251 = pneg %p86
        %p252 = pneg %p83
        %p253 = scmp.lt.s32.totalorder %s27, 1
        %s254 = scalar_select %p253, %s27, 1
        %p255 = scmp.lt.s32.totalorder %s28, 0
        %s256 = scalar_select %p255, %s28, 0
        %s257 = smul.addr %s256, 2
        %s258 = smul.addr %s254, 2
        %s259 = sadd.s32 %s257, %s258
        %s260 = scalar_lea.vmem %s2, %s259
        %p261 = pneg %p114
        %p262 = pneg %p111
        %p263 = pneg %p142
        %p264 = pneg %p139
        %s265 = sand.u32 %s129, 1
        %s266 = scalar_lea.sflag [#allocation4], %s265
        %s267 = sand.u32 %s129, 1
        %s268 = smul.addr %s267, 6
        %s269 = scalar_lea.vmem [#allocation7], %s268
        %p270 = scmp.lt.s32.totalorder %s27, 1
        %s271 = scalar_select %p270, %s27, 1
        %p272 = scmp.lt.s32.totalorder %s28, 0
        %s273 = scalar_select %p272, %s28, 0
        %s274 = smul.addr %s273, 2
        %s275 = smul.addr %s271, 2
        %s276 = sadd.s32 %s274, %s275
        %s277 = scalar_lea.vmem %s2, %s276
        %v278 = vld [vmem:[%s225] sm:$0x3]
        %v279 = vld [vmem:[%s234] sm:$0x3]
        %v280 = vsub.f32 %v279, 0.5
        %vm281 = vweird.f32 %v280
        %vm282 = vmxor %vm281, 1
        %v283 = vsel %vm282, %v280, 0.0
        %v284 = vld [vmem:[%s277] sm:$0x3]
        %v285 = vsub.f32 %v284, 0.5
        %vm286 = vweird.f32 %v285
        %vm287 = vmxor %vm286, 1
        %v288 = vsel %vm287, %v285, 0.0
        %v289 = vmul.f32 %v283, 1.403
        %v290 = vadd.f32 %v278, %v289
        %v291 = vmax.f32 %v290, 0.0
        %v292 = vmin.f32 %v291, 1.0
        %vm293 = vcmp.ne.f32.partialorder %v292, %v292
        %v294 = vsel %vm293, 0.0, %v292
        %v295 = vlaneseq
        %vm296 = vcmp.ge.s32.totalorder %v295, 0
        %vm297 = vcmp.lt.s32.totalorder %v295, 256
        %vm298 = vmand %vm296, %vm297
        %299 = vst.msk [vmem:[%s269] sm:$0x3] %vm298, %v294
        %v300 = vmul.f32 %v288, 0.344
        %v301 = vsub.f32 %v278, %v300
        %v302 = vmul.f32 %v283, 0.714
        %v303 = vsub.f32 %v301, %v302
        %v304 = vmax.f32 %v303, 0.0
        %v305 = vmin.f32 %v304, 1.0
        %vm306 = vcmp.ne.f32.partialorder %v305, %v305
        %v307 = vsel %vm306, 0.0, %v305
        %s308 = scalar_lea.vmem %s269, 2 [#allocation7]
        %309 = vst.msk [vmem:[%s308] sm:$0x3] %vm298, %v307
        %v310 = vmul.f32 %v288, 1.773
        %v311 = vadd.f32 %v278, %v310
        %v312 = vmax.f32 %v311, 0.0
        %v313 = vmin.f32 %v312, 1.0
        %vm314 = vcmp.ne.f32.partialorder %v313, %v313
        %v315 = vsel %vm314, 0.0, %v313
        %s316 = scalar_lea.vmem %s269, 4 [#allocation7]
        %317 = vst.msk [vmem:[%s316] sm:$0x3] %vm298, %v315
        %s318 = sand.u32 %s129, 1
        %s319 = scalar_lea.sflag [#allocation4], %s318
        %s320 = sand.u32 %s129, 1
        %s321 = smul.addr %s320, 6
        %s322 = scalar_lea.vmem [#allocation7], %s321
        // Predicated region
        $region41: #{tpu_custom_call.1} parent=31 // pred_check
          %p323 = pneg %p139
        $region42: #{tpu_custom_call.1} parent=31 // pred_check_branch
          %325 = sbr.rel (%p323) target = $region44
        $region43: #{tpu_custom_call.1} parent=31 // pred_region
          %s327 = ssub.s32 96, 96
          %328 = vsyncadd %s319, %s327
          %s329 = smul.addr %s28, 2
          %s330 = smul.addr %s27, 6
          %s331 = sadd.s32 %s329, %s330
          %s332 = smul.addr %s331, 16
          %s333 = scalar_lea.hbm %s3, %s332
          %s334 = sshll.u32 %s322, 4
          %s335 = int_to_ptr.vmem [resolvable:$true] %s334
          %340 = dma.vmem_to_hbm [thread:$0]  %s335, 96, %s333, %s319, 32, 32, 2
        $region44: #{tpu_custom_call.1} parent=31 // pred_fallthru
          _
      $region32: #{tpu_custom_call.1} parent=5 // pred_fallthru
        _
      %p341 = scmp.le.s32.totalorder 2, %s18
      // Predicated region
      $region45: #{tpu_custom_call.1} parent=5 // pred_check
        %p342 = pneg %p341
      $region46: #{tpu_custom_call.1} parent=5 // pred_check_branch
        %344 = sbr.rel (%p342) target = $region48
      $region47: #{tpu_custom_call.1} parent=5 // pred_region
        %s345 = ssub.s32 %s18, 2
        // Predicated region
        $region49: #{tpu_custom_call.1} parent=47 // pred_check
          %p346 = pneg %p145
        $region50: #{tpu_custom_call.1} parent=47 // pred_check_branch
          %348 = sbr.rel (%p346) target = $region52
        $region51: #{tpu_custom_call.1} parent=47 // pred_region
          %s349 = sand.u32 %s130, 1
          %s350 = scalar_lea.sflag [#allocation4], %s349
          %s351 = sand.u32 %s130, 1
          %s352 = smul.addr %s351, 6
          %s353 = scalar_lea.vmem [#allocation7], %s352
          %354 = dma.done %s350, 96
        $region52: #{tpu_custom_call.1} parent=47 // pred_fallthru
          _
      $region48: #{tpu_custom_call.1} parent=5 // pred_fallthru
        _
    $region6: #{tpu_custom_call.1} parent=1 // loop_footer
      %s22 = sadd.s32 1, %s18
    $region7: #{tpu_custom_call.1} parent=1 // loop_footer_branch
      %17 = sbr.rel target = $region3
    $region8: #{tpu_custom_call.1} parent=1 // loop_exit
      _
    %355 = vsyncpa [#allocation3], 1
    %s356 = scalar_lea.sflag [#allocation3], 1
    %357 = vsyncpa %s356, 1
    %358 = vsyncpa [#allocation6], 1
    %s359 = scalar_lea.sflag [#allocation6], 1
    %360 = vsyncpa %s359, 1
    %361 = vsyncpa [#allocation4], 1
    %s362 = scalar_lea.sflag [#allocation4], 1
    %363 = vsyncpa %s362, 1

</llo_original>
